<compile_context>
chip_gen: v7x
topology: tpu7x:2x2x1
jax: 0.10.0
libtpu: 0.0.40
codegen_flags: <defaults>
</compile_context>

<pallas_src>
import jax
import jax.numpy as jnp
from jax.experimental import pallas as pl
from jax.experimental.pallas import tpu as pltpu


def _round_up(v, m):
    return ((v + m - 1) // m) * m


def _cdiv(a, b):
    return (a + b - 1) // b


def value_net_kernel(xT_ref, w1T_ref, b1_ref, w2T_ref, b2_ref, w3_ref, b3_ref, o_ref):
    # Transposed layout: activations are (features, tm) so batch rows live on
    # the lane axis and the final value row is lane-dense.
    # fc1: bf16 operands on the MXU, f32 accumulation; bias/ReLU in f32 (VPU).
    h1 = jnp.dot(w1T_ref[...], xT_ref[...], preferred_element_type=jnp.float32)
    h1 = jnp.maximum(h1 + b1_ref[...], 0.0)                     # (H, tm) f32

    # fc2: cast activations back to bf16 only for the MXU operand.
    h2 = jnp.dot(w2T_ref[...], h1.astype(jnp.bfloat16),
                 preferred_element_type=jnp.float32)
    h2 = jnp.maximum(h2 + b2_ref[...], 0.0)                     # (H, tm) f32

    # value head (out_features == 1): f32 VPU multiply + cross-sublane (XLU)
    # reduction -> lane-dense (1, tm) row; no degenerate MXU matmul, no
    # relayout before the store.
    v = jnp.sum(h2 * w3_ref[...], axis=0, keepdims=True)        # (1, tm) f32
    o_ref[...] = (v + b3_ref[0, 0]).astype(o_ref.dtype)


def value_network_forward(x, params, *, block_rows=8192):
    """x: [B, input_dim] float32 -> [B, 1] float32."""
    w1T, b1, w2T, b2, w3, b3 = params          # PyTorch-native weight layout
    B, input_dim = x.shape
    hidden_dim = w1T.shape[0]

    # --- per-generation VMEM limit (v5e/v6e: 128 MiB phys -> 96 MiB,
    #     v7x: 64 MiB phys per TC -> 48 MiB). Fallback assumes the smallest.
    try:
        vmem_phys = int(pltpu.get_tpu_info().vmem_capacity_bytes)
    except Exception:
        vmem_phys = 64 * 1024 * 1024
    vmem_limit = min((vmem_phys * 3) // 4, 96 * 1024 * 1024)

    # --- batch-tile selection -------------------------------------------------
    # Resident blocks (constant index_map); Pallas double-buffers inputs, so
    # count them twice.
    resident = 2 * (
        hidden_dim * input_dim * 2          # w1^T bf16
        + hidden_dim * hidden_dim * 2       # w2^T bf16
        + 3 * hidden_dim * 4                # b1, b2, w3 columns (f32)
    )
    # Streamed / intermediate bytes per batch row inside one tile.
    per_row = (
        2 * 2 * input_dim                   # x^T column, bf16, double-buffered
        + 2 * 4                             # output element, f32, double-buffered
        + 2 * 4 * hidden_dim                # h1 / h2 f32 intermediates
        + 2 * hidden_dim                    # bf16 copy of h1 fed to fc2
    )
    tile_budget = max(vmem_limit // 2 - resident, 256 * per_row)
    cap_rows = max(256, (tile_budget // per_row) // 256 * 256)

    # Balanced tiles: choose the number of tiles first, then a 256-aligned tm,
    # so padding waste stays bounded instead of padding B up to a fixed tile.
    target = max(256, min(_round_up(block_rows, 256), cap_rows))
    n_tiles = _cdiv(max(B, 1), target)
    tm = min(_round_up(_cdiv(max(B, 1), n_tiles), 256), cap_rows)
    b_pad = n_tiles * tm

    if b_pad != B:
        x = jnp.pad(x, ((0, b_pad - B), (0, 0)))

    # One fused XLA pass: transpose to features-major and cast to bf16.
    x_t = jnp.transpose(x).astype(jnp.bfloat16)                 # (input_dim, b_pad)
    w1T_bf = w1T.astype(jnp.bfloat16)
    w2T_bf = w2T.astype(jnp.bfloat16)

    grid = (n_tiles,)
    const2 = lambda i: (0, 0)

    flops = 2 * b_pad * (input_dim * hidden_dim + hidden_dim * hidden_dim + hidden_dim)
    bytes_accessed = (
        x_t.size * 2 + w1T_bf.size * 2 + w2T_bf.size * 2
        + (b1.size + b2.size + w3.size + b3.size) * 4
        + b_pad * 4
    )

    out = pl.pallas_call(
        value_net_kernel,
        out_shape=jax.ShapeDtypeStruct((1, b_pad), jnp.float32),
        grid=grid,
        in_specs=[
            pl.BlockSpec((input_dim, tm), lambda i: (0, i)),        # x^T (streamed)
            pl.BlockSpec((hidden_dim, input_dim), const2),          # w1^T (resident)
            pl.BlockSpec((hidden_dim, 1), const2),                  # b1 column
            pl.BlockSpec((hidden_dim, hidden_dim), const2),         # w2^T (resident)
            pl.BlockSpec((hidden_dim, 1), const2),                  # b2 column
            pl.BlockSpec((hidden_dim, 1), const2),                  # w3 column (f32)
            pl.BlockSpec(memory_space=pltpu.MemorySpace.SMEM),      # b3 scalar
        ],
        out_specs=pl.BlockSpec((1, tm), lambda i: (0, i)),
        compiler_params=pltpu.CompilerParams(
            dimension_semantics=("parallel",),
            vmem_limit_bytes=int(vmem_limit),
        ),
        cost_estimate=pl.CostEstimate(
            flops=int(flops), transcendentals=0, bytes_accessed=int(bytes_accessed)
        ),
    )(x_t, w1T_bf, b1, w2T_bf, b2, w3, b3)

    return out[0, :B].reshape(B, 1)


def init_params(key, input_dim, hidden_dim):
    """Deterministic init mimicking nn.Linear's U(-1/sqrt(fan_in), 1/sqrt(fan_in)).

    Weights are kept in PyTorch-native layout (out_features, in_features), which
    is exactly what the transposed kernel consumes; biases / value-head weight
    are stored as (features, 1) columns, b3 as (1, 1).
    """
    keys = jax.random.split(key, 6)

    def linear(kw, kb, fan_in, fan_out):
        bound = 1.0 / jnp.sqrt(jnp.float32(fan_in))
        w = jax.random.uniform(kw, (fan_out, fan_in), jnp.float32, -bound, bound)
        b = jax.random.uniform(kb, (fan_out, 1), jnp.float32, -bound, bound)
        return w, b

    w1T, b1 = linear(keys[0], keys[1], input_dim, hidden_dim)    # (H, K), (H, 1)
    w2T, b2 = linear(keys[2], keys[3], hidden_dim, hidden_dim)   # (H, H), (H, 1)
    w3T, b3 = linear(keys[4], keys[5], hidden_dim, 1)            # (1, H), (1, 1)
    w3 = w3T.T                                                   # (H, 1) column
    return (w1T, b1, w2T, b2, w3, b3)


def reference_forward(x, params):
    """Pure-JAX f32 reference of the PyTorch module."""
    w1T, b1, w2T, b2, w3, b3 = params
    h1 = jnp.maximum(x @ w1T.T + b1[:, 0], 0.0)
    h2 = jnp.maximum(h1 @ w2T.T + b2[:, 0], 0.0)
    return h2 @ w3 + b3[0, 0]


if __name__ == "__main__":
    B, input_dim, hidden_dim = 64, 16, 32

    key = jax.random.PRNGKey(0)
    key_x, key_p = jax.random.split(key)
    x = jax.random.normal(key_x, (B, input_dim), dtype=jnp.float32)
    params = init_params(key_p, input_dim, hidden_dim)

    out = jax.block_until_ready(value_network_forward(x, params))
    ref = reference_forward(x, params)

    assert out.shape == (B, 1), out.shape
    # bf16 matmul operands with f32 accumulation -> small numeric difference
    # vs. the pure-f32 reference.
    assert jnp.allclose(out, ref, atol=5e-2, rtol=5e-2), "mismatch vs JAX reference"

    print("KERNEL_OK")
</pallas_src>

<mosaic_0001>
module attributes {stable_mosaic.version = 11 : i64} {
  func.func @value_net_kernel(%arg0: i32, %arg1: memref<16x256xbf16, #tpu.memory_space<vmem>>, %arg2: memref<32x16xbf16, #tpu.memory_space<vmem>>, %arg3: memref<32x1xf32, #tpu.memory_space<vmem>>, %arg4: memref<32x32xbf16, #tpu.memory_space<vmem>>, %arg5: memref<32x1xf32, #tpu.memory_space<vmem>>, %arg6: memref<32x1xf32, #tpu.memory_space<vmem>>, %arg7: memref<1x1xf32, #tpu.memory_space<smem>>, %arg8: memref<1x256xf32, #tpu.memory_space<vmem>>) attributes {dimension_semantics = [#tpu.dimension_semantics<parallel>], iteration_bounds = array<i64: 1>, scalar_prefetch = 0 : i64, scratch_operands = 0 : i64, tpu.core_type = #tpu.core_type<tc>, window_params = [{transform_indices = @transform_0, window_bounds = array<i64: 16, 256>}, {pipeline_mode = #tpu.pipeline_mode<synchronous>, transform_indices = @transform_1, window_bounds = array<i64: 32, 16>}, {pipeline_mode = #tpu.pipeline_mode<synchronous>, transform_indices = @transform_2, window_bounds = array<i64: 32, 1>}, {pipeline_mode = #tpu.pipeline_mode<synchronous>, transform_indices = @transform_3, window_bounds = array<i64: 32, 32>}, {pipeline_mode = #tpu.pipeline_mode<synchronous>, transform_indices = @transform_4, window_bounds = array<i64: 32, 1>}, {pipeline_mode = #tpu.pipeline_mode<synchronous>, transform_indices = @transform_5, window_bounds = array<i64: 32, 1>}, {transform_indices = @transform_6, window_bounds = array<i64: 1, 1>}, {transform_indices = @transform_7, window_bounds = array<i64: 1, 256>}]} {
    %c0 = arith.constant 0 : index
    %c0_0 = arith.constant 0 : index
    %0 = vector.load %arg2[%c0, %c0_0] : memref<32x16xbf16, #tpu.memory_space<vmem>>, vector<32x16xbf16>
    %c0_1 = arith.constant 0 : index
    %c0_2 = arith.constant 0 : index
    %1 = vector.load %arg1[%c0_1, %c0_2] : memref<16x256xbf16, #tpu.memory_space<vmem>>, vector<16x256xbf16>
    %cst = arith.constant dense<0.000000e+00> : vector<32x256xf32>
    %2 = tpu.matmul %0, %1, %cst {dimension_numbers = #tpu.dot_dimension_numbers<[1], [0], [0], [1], [0, 0, 1, 1], [], []>} : vector<32x16xbf16>, vector<16x256xbf16>, vector<32x256xf32> -> vector<32x256xf32>
    %c0_3 = arith.constant 0 : index
    %c0_4 = arith.constant 0 : index
    %3 = vector.load %arg3[%c0_3, %c0_4] : memref<32x1xf32, #tpu.memory_space<vmem>>, vector<32x1xf32>
    %4 = vector.broadcast %3 : vector<32x1xf32> to vector<32x256xf32>
    %5 = arith.addf %2, %4 : vector<32x256xf32>
    %cst_5 = arith.constant 0.000000e+00 : f32
    %6 = vector.broadcast %cst_5 : f32 to vector<32x256xf32>
    %7 = arith.maximumf %5, %6 : vector<32x256xf32>
    %c0_6 = arith.constant 0 : index
    %c0_7 = arith.constant 0 : index
    %8 = vector.load %arg4[%c0_6, %c0_7] : memref<32x32xbf16, #tpu.memory_space<vmem>>, vector<32x32xbf16>
    %9 = arith.truncf %7 : vector<32x256xf32> to vector<32x256xbf16>
    %cst_8 = arith.constant dense<0.000000e+00> : vector<32x256xf32>
    %10 = tpu.matmul %8, %9, %cst_8 {dimension_numbers = #tpu.dot_dimension_numbers<[1], [0], [0], [1], [0, 0, 1, 1], [], []>} : vector<32x32xbf16>, vector<32x256xbf16>, vector<32x256xf32> -> vector<32x256xf32>
    %c0_9 = arith.constant 0 : index
    %c0_10 = arith.constant 0 : index
    %11 = vector.load %arg5[%c0_9, %c0_10] : memref<32x1xf32, #tpu.memory_space<vmem>>, vector<32x1xf32>
    %12 = vector.broadcast %11 : vector<32x1xf32> to vector<32x256xf32>
    %13 = arith.addf %10, %12 : vector<32x256xf32>
    %cst_11 = arith.constant 0.000000e+00 : f32
    %14 = vector.broadcast %cst_11 : f32 to vector<32x256xf32>
    %15 = arith.maximumf %13, %14 : vector<32x256xf32>
    %c0_12 = arith.constant 0 : index
    %c0_13 = arith.constant 0 : index
    %16 = vector.load %arg6[%c0_12, %c0_13] : memref<32x1xf32, #tpu.memory_space<vmem>>, vector<32x1xf32>
    %17 = vector.broadcast %16 : vector<32x1xf32> to vector<32x256xf32>
    %18 = arith.mulf %15, %17 : vector<32x256xf32>
    %cst_14 = arith.constant dense<0.000000e+00> : vector<256xf32>
    %19 = vector.multi_reduction <add>, %18, %cst_14 [0] : vector<32x256xf32> to vector<256xf32>
    %20 = vector.shape_cast %19 : vector<256xf32> to vector<1x256xf32>
    %c0_15 = arith.constant 0 : index
    %c0_16 = arith.constant 0 : index
    %21 = memref.load %arg7[%c0_15, %c0_16] : memref<1x1xf32, #tpu.memory_space<smem>>
    %22 = vector.broadcast %21 : f32 to vector<1x256xf32>
    %23 = arith.addf %20, %22 : vector<1x256xf32>
    %c0_17 = arith.constant 0 : index
    %c0_18 = arith.constant 0 : index
    %24 = vector.load %arg8[%c0_17, %c0_18] : memref<1x256xf32, #tpu.memory_space<vmem>>, vector<1x256xf32>
    tpu.vector_store %arg8[%c0_17, %c0_18], %23 {strides = array<i32>} : memref<1x256xf32, #tpu.memory_space<vmem>>, vector<1x256xf32>,
    return
  }
  func.func @transform_0(%arg0: i32) -> (i32, i32) {
    %c0_i32 = arith.constant 0 : i32
    %c0_i32_0 = arith.constant 0 : i32
    return %c0_i32, %arg0 : i32, i32
  }
  func.func @transform_1(%arg0: i32) -> (i32, i32) {
    %c0_i32 = arith.constant 0 : i32
    %c0_i32_0 = arith.constant 0 : i32
    %c0_i32_1 = arith.constant 0 : i32
    return %c0_i32, %c0_i32_0 : i32, i32
  }
  func.func @transform_2(%arg0: i32) -> (i32, i32) {
    %c0_i32 = arith.constant 0 : i32
    %c0_i32_0 = arith.constant 0 : i32
    %c0_i32_1 = arith.constant 0 : i32
    return %c0_i32, %c0_i32_0 : i32, i32
  }
  func.func @transform_3(%arg0: i32) -> (i32, i32) {
    %c0_i32 = arith.constant 0 : i32
    %c0_i32_0 = arith.constant 0 : i32
    %c0_i32_1 = arith.constant 0 : i32
    return %c0_i32, %c0_i32_0 : i32, i32
  }
  func.func @transform_4(%arg0: i32) -> (i32, i32) {
    %c0_i32 = arith.constant 0 : i32
    %c0_i32_0 = arith.constant 0 : i32
    %c0_i32_1 = arith.constant 0 : i32
    return %c0_i32, %c0_i32_0 : i32, i32
  }
  func.func @transform_5(%arg0: i32) -> (i32, i32) {
    %c0_i32 = arith.constant 0 : i32
    %c0_i32_0 = arith.constant 0 : i32
    %c0_i32_1 = arith.constant 0 : i32
    return %c0_i32, %c0_i32_0 : i32, i32
  }
  func.func @transform_6(%arg0: i32) -> (i32, i32) {
    %c0_i32 = arith.constant 0 : i32
    %c0_i32_0 = arith.constant 0 : i32
    %c0_i32_1 = arith.constant 0 : i32
    return %c0_i32, %c0_i32_0 : i32, i32
  }
  func.func @transform_7(%arg0: i32) -> (i32, i32) {
    %c0_i32 = arith.constant 0 : i32
    %c0_i32_0 = arith.constant 0 : i32
    return %c0_i32, %arg0 : i32, i32
  }
}

</mosaic_0001>

<llo_original>
// kernel: tpu_custom_call.1
$region0: #{tpu_custom_call.1}
  #allocation0 [shape = 'u32[]', space=smem, size = 0x4, offset = 0x4, fixed_abs, tag = 'smem constant byte address 0x4 - core index']
  #allocation1 [shape = 'u32[144,128]{1,0:T(1,128)}', space=vmem, size = 0x12000, scoped, tag = 'internal scratch']
  #allocation2 [shape = 'f32[1,1]{1,0:T(1,128)S(6)}', space=smem, size = 0x200, scoped, tag = 'scoped memory for tpu_custom_call.1']
  %s0 = inlined_call_operand.vmem [shape: bf16[16,256], index: 0, kind: input, shape index: {}]
  %s1 = inlined_call_operand.vmem [shape: bf16[32,16], index: 1, kind: input, shape index: {}]
  %s2 = inlined_call_operand.vmem [shape: f32[32,1], index: 2, kind: input, shape index: {}]
  %s3 = inlined_call_operand.vmem [shape: bf16[32,32], index: 3, kind: input, shape index: {}]
  %s4 = inlined_call_operand.vmem [shape: f32[32,1], index: 4, kind: input, shape index: {}]
  %s5 = inlined_call_operand.vmem [shape: f32[32,1], index: 5, kind: input, shape index: {}]
  %s6 = inlined_call_operand.<no memory space> [shape: f32[1,1], index: 6, kind: input, shape index: {}]
  %s7 = inlined_call_operand.hbm [shape: f32[1,256], index: 7, kind: output, shape index: {}]
  %s8 = sld [smem:[#allocation0]]
  $region38: #{tpu_custom_call.1} parent=0
    _
  %s10 = ssub.s32 1, %s8
  %s11 = scalar_select 0, %s10, %s8
  %12 = sst [smem:[#allocation2]] %s6
  $region1: #{tpu_custom_call.1} parent=0
    #allocation3 [shape = 'u8[1024]{0}', space=vmem, size = 0x400, scoped, tag = 'output window, operand 0, single buffered']
    #allocation4 [shape = 's32[1]{0}', space=sflag, size = 0x4, scoped, tag = 'scoped memory for tpu_custom_call.1']
    %13 = vsyncpa [#allocation4], 0
    // Predicated region
    $region2: #{tpu_custom_call.1} parent=1 // pred_check
      _
    $region3: #{tpu_custom_call.1} parent=1 // pred_check_branch
      %15 = sbr.rel (0) target = $region5
    $region4: #{tpu_custom_call.1} parent=1 // pred_region
      _
    $region5: #{tpu_custom_call.1} parent=1 // pred_fallthru
      _
    // Predicated region
    $region6: #{tpu_custom_call.1} parent=1 // pred_check
      _
    $region7: #{tpu_custom_call.1} parent=1 // pred_check_branch
      %17 = sbr.rel (0) target = $region9
    $region8: #{tpu_custom_call.1} parent=1 // pred_region
      _
    $region9: #{tpu_custom_call.1} parent=1 // pred_fallthru
      _
    // Predicated region
    $region10: #{tpu_custom_call.1} parent=1 // pred_check
      _
    $region11: #{tpu_custom_call.1} parent=1 // pred_check_branch
      %19 = sbr.rel (0) target = $region13
    $region12: #{tpu_custom_call.1} parent=1 // pred_region
      _
    $region13: #{tpu_custom_call.1} parent=1 // pred_fallthru
      _
    // Predicated region
    $region14: #{tpu_custom_call.1} parent=1 // pred_check
      _
    $region15: #{tpu_custom_call.1} parent=1 // pred_check_branch
      %21 = sbr.rel (0) target = $region17
    $region16: #{tpu_custom_call.1} parent=1 // pred_region
      _
    $region17: #{tpu_custom_call.1} parent=1 // pred_fallthru
      _
    // Predicated region
    $region18: #{tpu_custom_call.1} parent=1 // pred_check
      _
    $region19: #{tpu_custom_call.1} parent=1 // pred_check_branch
      %23 = sbr.rel (0) target = $region21
    $region20: #{tpu_custom_call.1} parent=1 // pred_region
      _
    $region21: #{tpu_custom_call.1} parent=1 // pred_fallthru
      _
    // Predicated region
    $region22: #{tpu_custom_call.1} parent=1 // pred_check
      _
    $region23: #{tpu_custom_call.1} parent=1 // pred_check_branch
      %25 = sbr.rel (0) target = $region25
    $region24: #{tpu_custom_call.1} parent=1 // pred_region
      _
    $region25: #{tpu_custom_call.1} parent=1 // pred_fallthru
      _
    // Predicated region
    $region26: #{tpu_custom_call.1} parent=1 // pred_check
      _
    $region27: #{tpu_custom_call.1} parent=1 // pred_check_branch
      %27 = sbr.rel (0) target = $region29
    $region28: #{tpu_custom_call.1} parent=1 // pred_region
      _
    $region29: #{tpu_custom_call.1} parent=1 // pred_fallthru
      _
    %v29 = vld [vmem:[%s1] sm:$0xf]
    %v30 = vld [vmem:[%s1 + $0x4] sm:$0xf]
    %v31 = vld [vmem:[%s1 + $0x8] sm:$0xf]
    %v32 = vld [vmem:[%s1 + $0xc] sm:$0xf]
    %v33 = vld [vmem:[%s0] sm:$0xff]
    %v34 = vld [vmem:[%s0 + $0x8] sm:$0xff]
    %v35 = vld [vmem:[%s2] sm:$0xff]
    %v36 = vld [vmem:[%s2 + $0x8] sm:$0xff]
    %v37 = vld [vmem:[%s2 + $0x10] sm:$0xff]
    %v38 = vld [vmem:[%s2 + $0x18] sm:$0xff]
    %40 = vset.pattern.permute.xlu0 0
    %41 = vperm.xlu0 %40, %v35
    %v42 = vpop.permute.xlu0 %41
    %45 = vset.pattern.permute.xlu0 0
    %46 = vperm.xlu0 %45, %v36
    %v47 = vpop.permute.xlu0 %46
    %50 = vset.pattern.permute.xlu0 0
    %51 = vperm.xlu0 %50, %v37
    %v52 = vpop.permute.xlu0 %51
    %55 = vset.pattern.permute.xlu0 0
    %56 = vperm.xlu0 %55, %v38
    %v57 = vpop.permute.xlu0 %56
    %v63 = vunpack.c.l.b16 %v29
    %v64 = vunpack.c.l.b16 %v30
    %v65 = vunpack.c.l.b16 %v31
    %v66 = vunpack.c.l.b16 %v32
    %v67 = vpack.c.b16 %v64, %v63
    %v68 = vpack.c.b16 %v66, %v65
    %v71 = vunpack.c.l.b16 %v33
    %v72 = vunpack.c.h.b16 %v33
    %v73 = vunpack.c.l.b16 %v34
    %v74 = vunpack.c.h.b16 %v34
    %v75 = vpack.c.b16 %v73, %v71
    %v76 = vpack.c.b16 %v74, %v72
    %vm79 = vcmask 130048
    %v81 = vsel %vm79, %v67, 0
    %v84 = vsel %vm79, %v68, 0
    %86 = vmatprep.subr.bf16.mxu0 %v76
    %87 = vmatpush1.bf16.msra.mxu0 %v75
    %88 = vmatprep.subr.bf16.mxu0 0
    %89 = vmatpush1.bf16.msra.mxu0 0
    %90 = vmatprep.subr.bf16.mxu0 0
    %91 = vmatpush1.bf16.msra.mxu0 0
    %92 = vmatprep.subr.bf16.mxu0 0
    %93 = vmatpush1.bf16.msra.mxu0 0
    %94 = vmatprep.subr.bf16.mxu0 0
    %95 = vmatpush1.bf16.msra.mxu0 0
    %96 = vmatprep.subr.bf16.mxu0 0
    %97 = vmatpush1.bf16.msra.mxu0 0
    %98 = vmatprep.subr.bf16.mxu0 0
    %99 = vmatpush1.bf16.msra.mxu0 0
    %100 = vmatprep.subr.bf16.mxu0 0
    %101 = vmatpush1.bf16.msra.mxu0 0
    %102 = vmatprep.subr.bf16.mxu0 0
    %103 = vmatpush1.bf16.msra.mxu0 0
    %104 = vmatprep.subr.bf16.mxu0 0
    %105 = vmatpush1.bf16.msra.mxu0 0
    %106 = vmatprep.subr.bf16.mxu0 0
    %107 = vmatpush1.bf16.msra.mxu0 0
    %108 = vmatprep.subr.bf16.mxu0 0
    %109 = vmatpush1.bf16.msra.mxu0 0
    %110 = vmatprep.subr.bf16.mxu0 0
    %111 = vmatpush1.bf16.msra.mxu0 0
    %112 = vmatprep.subr.bf16.mxu0 0
    %113 = vmatpush1.bf16.msra.mxu0 0
    %114 = vmatprep.subr.bf16.mxu0 0
    %115 = vmatpush1.bf16.msra.mxu0 0
    %116 = vmatprep.subr.bf16.mxu0 0
    %117 = vmatpush1.bf16.msra.mxu0 0
    %118 = vmatprep.mubr.bf16.mxu0 0
    %119 = vmatmul.mubr.bf16.gmra.mrb[0].mxu0 %v81
    %v120 = vpop.f32.mrb[0].mxu0
    %v121 = vadd.f32 %v42, %v120
    %v122 = vpop.f32.mrb[0].mxu0
    %v123 = vadd.f32 %v42, %v122
    %v124 = vpop.f32.mrb[0].mxu0
    %v125 = vadd.f32 %v47, %v124
    %v126 = vpop.f32.mrb[0].mxu0
    %v127 = vadd.f32 %v47, %v126
    %128 = vmatprep.mubr.bf16.mxu0 0
    %129 = vmatmul.mubr.bf16.gmra.mrb[0].mxu0 %v84
    %v130 = vpop.f32.mrb[0].mxu0
    %v131 = vadd.f32 %v52, %v130
    %v132 = vpop.f32.mrb[0].mxu0
    %v133 = vadd.f32 %v52, %v132
    %v134 = vpop.f32.mrb[0].mxu0
    %v135 = vadd.f32 %v57, %v134
    %v136 = vpop.f32.mrb[0].mxu0
    %v137 = vadd.f32 %v57, %v136
    %138 = vdwg.mxu0
    %v139 = vmax.f32 %v121, 0.0
    %v140 = vmax.f32 %v123, 0.0
    %v141 = vmax.f32 %v125, 0.0
    %v142 = vmax.f32 %v127, 0.0
    %v143 = vmax.f32 %v131, 0.0
    %v144 = vmax.f32 %v133, 0.0
    %v145 = vmax.f32 %v135, 0.0
    %v146 = vmax.f32 %v137, 0.0
    %v147 = vld [vmem:[%s3] sm:$0xf]
    %v148 = vld [vmem:[%s3 + $0x4] sm:$0xf]
    %v149 = vld [vmem:[%s3 + $0x8] sm:$0xf]
    %v150 = vld [vmem:[%s3 + $0xc] sm:$0xf]
    %v151 = vpack.c.bf16 %v141, %v139
    %v152 = vpack.c.bf16 %v142, %v140
    %v153 = vpack.c.bf16 %v145, %v143
    %v154 = vpack.c.bf16 %v146, %v144
    %v155 = vld [vmem:[%s4] sm:$0xff]
    %v156 = vld [vmem:[%s4 + $0x8] sm:$0xff]
    %v157 = vld [vmem:[%s4 + $0x10] sm:$0xff]
    %v158 = vld [vmem:[%s4 + $0x18] sm:$0xff]
    %160 = vset.pattern.permute.xlu0 0
    %161 = vperm.xlu0 %160, %v155
    %v162 = vpop.permute.xlu0 %161
    %165 = vset.pattern.permute.xlu0 0
    %166 = vperm.xlu0 %165, %v156
    %v167 = vpop.permute.xlu0 %166
    %170 = vset.pattern.permute.xlu0 0
    %171 = vperm.xlu0 %170, %v157
    %v172 = vpop.permute.xlu0 %171
    %175 = vset.pattern.permute.xlu0 0
    %176 = vperm.xlu0 %175, %v158
    %v177 = vpop.permute.xlu0 %176
    %v183 = vunpack.c.l.b16 %v147
    %v184 = vunpack.c.l.b16 %v148
    %v185 = vunpack.c.l.b16 %v149
    %v186 = vunpack.c.l.b16 %v150
    %v187 = vpack.c.b16 %v184, %v183
    %v188 = vpack.c.b16 %v186, %v185
    %vm189 = vcmask 261120
    %v191 = vsel %vm189, %v187, 0
    %v194 = vsel %vm189, %v188, 0
    %196 = vmatprep.subr.bf16.mxu0 %v152
    %197 = vmatpush1.bf16.msra.mxu0 %v151
    %198 = vmatprep.subr.bf16.mxu0 %v154
    %199 = vmatpush1.bf16.msra.mxu0 %v153
    %200 = vmatprep.subr.bf16.mxu0 0
    %201 = vmatpush1.bf16.msra.mxu0 0
    %202 = vmatprep.subr.bf16.mxu0 0
    %203 = vmatpush1.bf16.msra.mxu0 0
    %204 = vmatprep.subr.bf16.mxu0 0
    %205 = vmatpush1.bf16.msra.mxu0 0
    %206 = vmatprep.subr.bf16.mxu0 0
    %207 = vmatpush1.bf16.msra.mxu0 0
    %208 = vmatprep.subr.bf16.mxu0 0
    %209 = vmatpush1.bf16.msra.mxu0 0
    %210 = vmatprep.subr.bf16.mxu0 0
    %211 = vmatpush1.bf16.msra.mxu0 0
    %212 = vmatprep.subr.bf16.mxu0 0
    %213 = vmatpush1.bf16.msra.mxu0 0
    %214 = vmatprep.subr.bf16.mxu0 0
    %215 = vmatpush1.bf16.msra.mxu0 0
    %216 = vmatprep.subr.bf16.mxu0 0
    %217 = vmatpush1.bf16.msra.mxu0 0
    %218 = vmatprep.subr.bf16.mxu0 0
    %219 = vmatpush1.bf16.msra.mxu0 0
    %220 = vmatprep.subr.bf16.mxu0 0
    %221 = vmatpush1.bf16.msra.mxu0 0
    %222 = vmatprep.subr.bf16.mxu0 0
    %223 = vmatpush1.bf16.msra.mxu0 0
    %224 = vmatprep.subr.bf16.mxu0 0
    %225 = vmatpush1.bf16.msra.mxu0 0
    %226 = vmatprep.subr.bf16.mxu0 0
    %227 = vmatpush1.bf16.msra.mxu0 0
    %228 = vmatprep.mubr.bf16.mxu0 0
    %229 = vmatmul.mubr.bf16.gmra.mrb[0].mxu0 %v191
    %v230 = vpop.f32.mrb[0].mxu0
    %v231 = vadd.f32 %v162, %v230
    %v232 = vpop.f32.mrb[0].mxu0
    %v233 = vadd.f32 %v162, %v232
    %v234 = vpop.f32.mrb[0].mxu0
    %v235 = vadd.f32 %v167, %v234
    %v236 = vpop.f32.mrb[0].mxu0
    %v237 = vadd.f32 %v167, %v236
    %238 = vmatprep.mubr.bf16.mxu0 0
    %239 = vmatmul.mubr.bf16.gmra.mrb[0].mxu0 %v194
    %v240 = vpop.f32.mrb[0].mxu0
    %v241 = vadd.f32 %v172, %v240
    %v242 = vpop.f32.mrb[0].mxu0
    %v243 = vadd.f32 %v172, %v242
    %v244 = vpop.f32.mrb[0].mxu0
    %v245 = vadd.f32 %v177, %v244
    %v246 = vpop.f32.mrb[0].mxu0
    %v247 = vadd.f32 %v177, %v246
    %248 = vdwg.mxu0
    %v249 = vmax.f32 %v231, 0.0
    %v250 = vmax.f32 %v233, 0.0
    %v251 = vmax.f32 %v235, 0.0
    %v252 = vmax.f32 %v237, 0.0
    %v253 = vmax.f32 %v241, 0.0
    %v254 = vmax.f32 %v243, 0.0
    %v255 = vmax.f32 %v245, 0.0
    %v256 = vmax.f32 %v247, 0.0
    %v257 = vld [vmem:[%s5] sm:$0xff]
    %v258 = vld [vmem:[%s5 + $0x8] sm:$0xff]
    %v259 = vld [vmem:[%s5 + $0x10] sm:$0xff]
    %v260 = vld [vmem:[%s5 + $0x18] sm:$0xff]
    %262 = vset.pattern.permute.xlu0 0
    %263 = vperm.xlu0 %262, %v257
    %v264 = vpop.permute.xlu0 %263
    %267 = vset.pattern.permute.xlu0 0
    %268 = vperm.xlu0 %267, %v258
    %v269 = vpop.permute.xlu0 %268
    %272 = vset.pattern.permute.xlu0 0
    %273 = vperm.xlu0 %272, %v259
    %v274 = vpop.permute.xlu0 %273
    %277 = vset.pattern.permute.xlu0 0
    %278 = vperm.xlu0 %277, %v260
    %v279 = vpop.permute.xlu0 %278
    %v281 = vmul.f32 %v249, %v264
    %v282 = vmul.f32 %v250, %v264
    %v283 = vmul.f32 %v251, %v269
    %v284 = vmul.f32 %v252, %v269
    %v285 = vmul.f32 %v253, %v274
    %v286 = vmul.f32 %v254, %v274
    %v287 = vmul.f32 %v255, %v279
    %v288 = vmul.f32 %v256, %v279
    %v289 = vadd.f32 %v281, %v283
    %v290 = vadd.f32 %v289, %v285
    %v291 = vadd.f32 %v290, %v287
    %v292 = vrot.slane %v291, 4
    %v293 = vadd.f32 %v291, %v292
    %v294 = vrot.slane %v293, 2
    %v295 = vadd.f32 %v293, %v294
    %v296 = vrot.slane %v295, 1
    %v297 = vadd.f32 %v295, %v296
    %v298 = vadd.f32 %v282, %v284
    %v299 = vadd.f32 %v298, %v286
    %v300 = vadd.f32 %v299, %v288
    %v301 = vrot.slane %v300, 4
    %v302 = vadd.f32 %v300, %v301
    %v303 = vrot.slane %v302, 2
    %v304 = vadd.f32 %v302, %v303
    %v305 = vrot.slane %v304, 1
    %v306 = vadd.f32 %v304, %v305
    %s307 = sld [smem:[#allocation2]]
    %v308 = vstv %s307
    %v309 = vadd.f32 %v297, %v308
    %v310 = vadd.f32 %v306, %v308
    %v313 = vcombine.low %v309, %v310
    %v315 = vunpack.c.l.s4 1966171168
    %v316 = vunpack.c.0.s8 %v315
    %v317 = vlaneseq
    %v318 = vshrl.u32 %v317, 7
    %v319 = vsub.s32 %v316, %v318
    %v320 = vrot.slane %v313, %v319
    %v322 = vunpack.c.l.s4 1966171168
    %v323 = vunpack.c.0.s8 %v322
    %v324 = vlaneseq
    %v325 = vshrl.u32 %v324, 7
    %v326 = vsub.s32 %v323, %v325
    %v327 = vrot.slane %v320, %v326
    %v329 = vlaneseq
    %vm330 = vcmp.ge.s32.totalorder %v329, 0
    %vm331 = vcmp.lt.s32.totalorder %v329, 256
    %vm332 = vmand %vm330, %vm331
    %333 = vst.msk [vmem:[#allocation3] sm:$0x3] %vm332, %v327
    // Predicated region
    $region30: #{tpu_custom_call.1} parent=1 // pred_check
      _
    $region31: #{tpu_custom_call.1} parent=1 // pred_check_branch
      %335 = sbr.rel (0) target = $region33
    $region32: #{tpu_custom_call.1} parent=1 // pred_region
      %s337 = ssub.s32 32, 32
      %338 = vsyncadd [#allocation4], %s337
      %s340 = sshll.u32 [#allocation3], 4
      %s341 = int_to_ptr.vmem [resolvable:$true] %s340
      %343 = dma.vmem_to_hbm [thread:$0]  %s341, 32, %s7, [#allocation4]
    $region33: #{tpu_custom_call.1} parent=1 // pred_fallthru
      _
    // Predicated region
    $region34: #{tpu_custom_call.1} parent=1 // pred_check
      _
    $region35: #{tpu_custom_call.1} parent=1 // pred_check_branch
      %345 = sbr.rel (0) target = $region37
    $region36: #{tpu_custom_call.1} parent=1 // pred_region
      %346 = dma.done [#allocation4], 32
    $region37: #{tpu_custom_call.1} parent=1 // pred_fallthru
      _
    %347 = vsyncpa [#allocation4], 1

</llo_original>
